<compile_context>
chip_gen: v6e
topology: v6e:2x2x1
jax: 0.10.0
libtpu: 0.0.40
codegen_flags: <defaults>
</compile_context>

<pallas_src>
import jax
import jax.numpy as jnp
from jax import lax
from jax.experimental import pallas as pl
from jax.experimental.pallas import tpu as pltpu

ALPHA = 2.0
BETA = 50.0
BASE = 0.5
_LANE = 128


def _vmem_capacity_bytes():
    try:
        return int(pltpu.get_tpu_info().vmem_capacity_bytes)
    except Exception:
        return 64 << 20                 # conservative fallback (v7x per-core VMEM)


def _estimate_vmem(T, D, B_pad, col_resident, itemsize):
    row_tiles = 2 * T * D * itemsize                            # double-buffered row tile
    col_tiles = (2 * B_pad * D * itemsize if col_resident       # resident (x2 safety)
                 else 2 * T * D * itemsize)                     # or tiled double-buffer
    temporaries = 6 * T * T * 4                                 # logits / e / masked tiles
    scratch = 2 * T * _LANE * 4                                 # lane-dense accumulators
    misc = 4 * T * 4 + 2 * T * 4 + (1 << 20)                    # labels, out block, headroom
    return row_tiles + col_tiles + temporaries + scratch + misc


def _pick_tile(B_pad, D, col_resident, itemsize, budget):
    for t in (512, 256, 128):
        if B_pad % t == 0 and _estimate_vmem(t, D, B_pad, col_resident, itemsize) <= budget:
            return t
    return 128


def msloss_angle(X, y, tile=None, compute_dtype=jnp.bfloat16):
    """X: (B, D) float features, y: (B,) integer labels -> scalar MS loss."""
    B, D = X.shape
    if y.shape[0] != B:
        raise ValueError("Num of labels does not match num of features")

    # ---- host-side prep (one memory-bound pass): F.normalize, pad, cast ----
    Xf = X.astype(jnp.float32)
    sq = jnp.sum(Xf * Xf, axis=1, keepdims=True)
    Xn = Xf * lax.rsqrt(jnp.maximum(sq, 1e-24))     # == x / max(||x||, 1e-12)

    B_pad = ((B + _LANE - 1) // _LANE) * _LANE
    labels = y.astype(jnp.int32)
    if B_pad != B:
        Xn = jnp.pad(Xn, ((0, B_pad - B), (0, 0)))
        labels = jnp.pad(labels, (0, B_pad - B), constant_values=-1)
    Xc = Xn.astype(compute_dtype)
    itemsize = jnp.dtype(compute_dtype).itemsize
    lab_row = labels.reshape(B_pad, 1)
    lab_col = labels.reshape(1, B_pad)

    cap = _vmem_capacity_bytes()
    col_resident = (2 * B_pad * D * itemsize) <= cap // 8
    budget = int(cap * 0.6)
    T = int(tile) if tile is not None else _pick_tile(B_pad, D, col_resident, itemsize, budget)
    if B_pad % T != 0 or T % _LANE != 0:
        raise ValueError(f"tile {T} must be a multiple of 128 dividing padded batch {B_pad}")
    nb = B_pad // T
    needs_col_mask = (B_pad != B)

    def kernel(x_row_ref, x_col_ref, lab_row_ref, lab_col_ref, out_ref,
               pos_acc, neg_acc):
        i = pl.program_id(0)            # row block   ("parallel")
        j = pl.program_id(1)            # column block (reduction, innermost)
        nj = pl.num_programs(1)

        @pl.when(j == 0)
        def _init():
            pos_acc[...] = jnp.zeros_like(pos_acc)
            neg_acc[...] = jnp.zeros_like(neg_acc)

        xr = x_row_ref[...]                                     # (T, D) compute_dtype
        if col_resident:
            start = pl.multiple_of(j * T, T)
            xc = x_col_ref[pl.ds(start, T), :]                  # slice of resident X
        else:
            xc = x_col_ref[...]                                 # (T, D)

        # (T, T) logits tile on the MXU (bf16 inputs, f32 accumulation).
        logits = lax.dot_general(xr, xc, (((1,), (1,)), ((), ())),
                                 preferred_element_type=jnp.float32)

        class_eq = lab_row_ref[...] == lab_col_ref[...]         # (T,1)==(1,T) -> (T,T)

        # Single exp per element; pos / neg branches are disjoint selections.
        scale = jnp.where(class_eq, -ALPHA, BETA)
        e = jnp.exp(scale * (logits - BASE))

        r = lax.broadcasted_iota(jnp.int32, (T, T), 0)
        c = lax.broadcasted_iota(jnp.int32, (T, T), 1)
        is_diag = (r == c) & (i == j)                           # self-similarity entries
        pos_pred = class_eq & jnp.logical_not(is_diag)
        neg_pred = jnp.logical_not(class_eq)
        if needs_col_mask:
            col_valid = (j * T + c) < B                         # drop padded columns
            pos_pred = pos_pred & col_valid
            neg_pred = neg_pred & col_valid

        pos_vals = jnp.where(pos_pred, e, 0.0)
        neg_vals = jnp.where(neg_pred, e, 0.0)

        # Deferred reduction: fold T columns into 128-lane chunks (VPU adds only),
        # accumulate lane-dense; the XLU lane-reduce happens once, at finalize.
        def lane_fold(v):
            acc = v[:, 0:_LANE]
            for kk in range(1, T // _LANE):
                acc = acc + v[:, kk * _LANE:(kk + 1) * _LANE]
            return acc

        pos_acc[...] += lane_fold(pos_vals)
        neg_acc[...] += lane_fold(neg_vals)

        @pl.when(j == nj - 1)
        def _finalize():
            pos_sum = jnp.sum(pos_acc[...], axis=1, keepdims=True)   # (T, 1)
            neg_sum = jnp.sum(neg_acc[...], axis=1, keepdims=True)
            loss = ((1.0 / ALPHA) * jnp.log(1.0 + pos_sum)
                    + (1.0 / BETA) * jnp.log(1.0 + neg_sum))
            out_ref[...] = loss.reshape(1, 1, T)                     # lane-dense write

    if col_resident:
        col_spec = pl.BlockSpec((B_pad, D), lambda i, j: (0, 0))     # resident operand
        col_bytes = B_pad * D * itemsize
    else:
        col_spec = pl.BlockSpec((T, D), lambda i, j: (j, 0))
        col_bytes = nb * B_pad * D * itemsize

    est = _estimate_vmem(T, D, B_pad, col_resident, itemsize)
    vmem_limit = int(min(int(cap * 0.75), max(32 << 20, 2 * est)))

    per_row = pl.pallas_call(
        kernel,
        out_shape=jax.ShapeDtypeStruct((nb, 1, T), jnp.float32),
        grid=(nb, nb),
        in_specs=[
            pl.BlockSpec((T, D), lambda i, j: (i, 0)),       # X row tile
            col_spec,                                        # X column operand
            pl.BlockSpec((T, 1), lambda i, j: (i, 0)),       # row-block labels
            pl.BlockSpec((1, T), lambda i, j: (0, j)),       # column-block labels
        ],
        out_specs=pl.BlockSpec((1, 1, T), lambda i, j: (i, 0, 0)),
        scratch_shapes=[
            pltpu.VMEM((T, _LANE), jnp.float32),             # pos running sums
            pltpu.VMEM((T, _LANE), jnp.float32),             # neg running sums
        ],
        compiler_params=pltpu.CompilerParams(
            dimension_semantics=("parallel", "arbitrary"),
            vmem_limit_bytes=vmem_limit),
        cost_estimate=pl.CostEstimate(
            flops=2 * B_pad * B_pad * D,
            transcendentals=B_pad * B_pad,
            bytes_accessed=B_pad * D * itemsize + col_bytes + 8 * B_pad * nb + 4 * B_pad),
    )(Xc, Xc, lab_row, lab_col)

    # TODO(synk): with nb == 1 the "parallel" axis cannot shard across v7x's two
    # TensorCores; a column-sweep split with a cross-core combine would engage both.
    per_row = per_row.reshape(-1)[:B]
    return jnp.mean(per_row)


def _reference(X, y):
    # Pure-JAX f32 mirror of the PyTorch forward, for the correctness check.
    B = X.shape[0]
    lab = y.reshape(-1, 1)
    class_eq = (lab == lab.T).astype(jnp.float32)
    self_mask = 1.0 - jnp.eye(B, dtype=jnp.float32)
    pos_mask = class_eq * self_mask
    neg_mask = 1.0 - class_eq
    Xn = X / jnp.maximum(jnp.linalg.norm(X, axis=1, keepdims=True), 1e-12)
    logits = Xn @ Xn.T
    pos_exp = jnp.exp(-ALPHA * (logits - BASE)) * pos_mask
    neg_exp = jnp.exp(BETA * (logits - BASE)) * neg_mask
    pos_loss = (1.0 / ALPHA) * jnp.log(1.0 + jnp.sum(pos_exp, axis=1))
    neg_loss = (1.0 / BETA) * jnp.log(1.0 + jnp.sum(neg_exp, axis=1))
    return jnp.mean(pos_loss + neg_loss)


if __name__ == "__main__":
    key = jax.random.PRNGKey(0)
    kx, ky = jax.random.split(key)

    # Small shape implied by the module: (batch, feature) embeddings + class labels.
    B, D = 8, 32
    X = jax.random.normal(kx, (B, D), dtype=jnp.float32)
    y = jax.random.randint(ky, (B,), 0, 3, dtype=jnp.int32)      # 3 classes

    loss = jax.block_until_ready(msloss_angle(X, y))
    ref = jax.block_until_ready(_reference(X, y))
    # bf16 MXU + BETA=50 in the exponent -> slightly looser tolerance than pure f32.
    assert jnp.abs(loss - ref) < 5e-3, (loss, ref)

    # Multi-block path: 2x2 grid of 128x128 logit tiles, no padding needed.
    k2x, k2y = jax.random.split(jax.random.PRNGKey(1))
    B2, D2 = 256, 32
    X2 = jax.random.normal(k2x, (B2, D2), dtype=jnp.float32)
    y2 = jax.random.randint(k2y, (B2,), 0, 8, dtype=jnp.int32)
    loss2 = jax.block_until_ready(msloss_angle(X2, y2, tile=128))
    ref2 = jax.block_until_ready(_reference(X2, y2))
    assert jnp.abs(loss2 - ref2) < 5e-3, (loss2, ref2)

    print("KERNEL_OK")
</pallas_src>

<mosaic_0001>
module attributes {stable_mosaic.version = 11 : i64} {
  func.func @kernel(%arg0: i32, %arg1: i32, %arg2: memref<128x32xbf16, #tpu.memory_space<vmem>>, %arg3: memref<128x32xbf16, #tpu.memory_space<vmem>>, %arg4: memref<128x1xi32, #tpu.memory_space<vmem>>, %arg5: memref<1x128xi32, #tpu.memory_space<vmem>>, %arg6: memref<1x1x128xf32, #tpu.memory_space<vmem>>, %arg7: memref<128x128xf32, #tpu.memory_space<vmem>>, %arg8: memref<128x128xf32, #tpu.memory_space<vmem>>) attributes {dimension_semantics = [#tpu.dimension_semantics<parallel>, #tpu.dimension_semantics<arbitrary>], iteration_bounds = array<i64: 1, 1>, scalar_prefetch = 0 : i64, scratch_operands = 2 : i64, tpu.core_type = #tpu.core_type<tc>, window_params = [{transform_indices = @transform_0, window_bounds = array<i64: 128, 32>}, {pipeline_mode = #tpu.pipeline_mode<synchronous>, transform_indices = @transform_1, window_bounds = array<i64: 128, 32>}, {transform_indices = @transform_2, window_bounds = array<i64: 128, 1>}, {transform_indices = @transform_3, window_bounds = array<i64: 1, 128>}, {transform_indices = @transform_4, window_bounds = array<i64: 1, 1, 128>}]} {
    %c0_i32 = arith.constant 0 : i32
    %0 = arith.cmpi eq, %arg1, %c0_i32 : i32
    %1 = arith.extui %0 : i1 to i32
    %c0_i32_0 = arith.constant 0 : i32
    %2 = arith.cmpi ne, %1, %c0_i32_0 : i32
    scf.if %2 {
      %cst_25 = arith.constant 0.000000e+00 : f32
      %50 = vector.broadcast %cst_25 : f32 to vector<128x128xf32>
      %c0_26 = arith.constant 0 : index
      %c0_27 = arith.constant 0 : index
      %51 = vector.load %arg7[%c0_26, %c0_27] : memref<128x128xf32, #tpu.memory_space<vmem>>, vector<128x128xf32>
      tpu.vector_store %arg7[%c0_26, %c0_27], %50 {strides = array<i32>} : memref<128x128xf32, #tpu.memory_space<vmem>>, vector<128x128xf32>,
      %cst_28 = arith.constant 0.000000e+00 : f32
      %52 = vector.broadcast %cst_28 : f32 to vector<128x128xf32>
      %c0_29 = arith.constant 0 : index
      %c0_30 = arith.constant 0 : index
      %53 = vector.load %arg8[%c0_29, %c0_30] : memref<128x128xf32, #tpu.memory_space<vmem>>, vector<128x128xf32>
      tpu.vector_store %arg8[%c0_29, %c0_30], %52 {strides = array<i32>} : memref<128x128xf32, #tpu.memory_space<vmem>>, vector<128x128xf32>,
    } else {
    }
    %c0 = arith.constant 0 : index
    %c0_1 = arith.constant 0 : index
    %3 = vector.load %arg2[%c0, %c0_1] : memref<128x32xbf16, #tpu.memory_space<vmem>>, vector<128x32xbf16>
    %c128_i32 = arith.constant 128 : i32
    %4 = arith.muli %arg1, %c128_i32 : i32
    %5 = tpu.assume_multiple %4, 128 : i32
    %6 = arith.index_cast %5 : i32 to index
    %c0_2 = arith.constant 0 : index
    %7 = vector.load %arg3[%6, %c0_2] : memref<128x32xbf16, #tpu.memory_space<vmem>>, vector<128x32xbf16>
    %cst = arith.constant dense<0.000000e+00> : vector<128x128xf32>
    %8 = tpu.matmul %3, %7, %cst {dimension_numbers = #tpu.dot_dimension_numbers<[1], [1], [0], [0], [0, 0, 1, 0], [], []>} : vector<128x32xbf16>, vector<128x32xbf16>, vector<128x128xf32> -> vector<128x128xf32>
    %c0_3 = arith.constant 0 : index
    %c0_4 = arith.constant 0 : index
    %9 = vector.load %arg4[%c0_3, %c0_4] : memref<128x1xi32, #tpu.memory_space<vmem>>, vector<128x1xi32>
    %c0_5 = arith.constant 0 : index
    %c0_6 = arith.constant 0 : index
    %10 = vector.load %arg5[%c0_5, %c0_6] : memref<1x128xi32, #tpu.memory_space<vmem>>, vector<1x128xi32>
    %11 = vector.broadcast %9 : vector<128x1xi32> to vector<128x128xi32>
    %12 = vector.broadcast %10 : vector<1x128xi32> to vector<128x128xi32>
    %13 = arith.cmpi eq, %11, %12 : vector<128x128xi32>
    %cst_7 = arith.constant -2.000000e+00 : f32
    %cst_8 = arith.constant 5.000000e+01 : f32
    %14 = vector.broadcast %cst_7 : f32 to vector<128x128xf32>
    %15 = vector.broadcast %cst_8 : f32 to vector<128x128xf32>
    %16 = arith.select %13, %14, %15 : vector<128x128xi1>, vector<128x128xf32>
    %cst_9 = arith.constant 5.000000e-01 : f32
    %17 = vector.broadcast %cst_9 : f32 to vector<128x128xf32>
    %18 = arith.subf %8, %17 : vector<128x128xf32>
    %19 = arith.mulf %16, %18 : vector<128x128xf32>
    %20 = math.exp %19 : vector<128x128xf32>
    %21 = tpu.iota {dimensions = array<i32: 0>} : vector<128x128xi32>
    %22 = tpu.iota {dimensions = array<i32: 1>} : vector<128x128xi32>
    %23 = arith.cmpi eq, %21, %22 : vector<128x128xi32>
    %24 = arith.cmpi eq, %arg0, %arg1 : i32
    %25 = vector.broadcast %24 : i1 to vector<128x128xi1>
    %26 = arith.andi %23, %25 : vector<128x128xi1>
    %cst_10 = arith.constant dense<true> : vector<128x128xi1>
    %27 = arith.xori %26, %cst_10 : vector<128x128xi1>
    %28 = arith.andi %13, %27 : vector<128x128xi1>
    %cst_11 = arith.constant dense<true> : vector<128x128xi1>
    %29 = arith.xori %13, %cst_11 : vector<128x128xi1>
    %c128_i32_12 = arith.constant 128 : i32
    %30 = arith.muli %arg1, %c128_i32_12 : i32
    %31 = vector.broadcast %30 : i32 to vector<128x128xi32>
    %32 = arith.addi %31, %22 : vector<128x128xi32>
    %c8_i32 = arith.constant 8 : i32
    %33 = vector.broadcast %c8_i32 : i32 to vector<128x128xi32>
    %34 = arith.cmpi slt, %32, %33 : vector<128x128xi32>
    %35 = arith.andi %28, %34 : vector<128x128xi1>
    %36 = arith.andi %29, %34 : vector<128x128xi1>
    %cst_13 = arith.constant 0.000000e+00 : f32
    %37 = vector.broadcast %cst_13 : f32 to vector<128x128xf32>
    %38 = arith.select %35, %20, %37 : vector<128x128xi1>, vector<128x128xf32>
    %cst_14 = arith.constant 0.000000e+00 : f32
    %39 = vector.broadcast %cst_14 : f32 to vector<128x128xf32>
    %40 = arith.select %36, %20, %39 : vector<128x128xi1>, vector<128x128xf32>
    %c0_15 = arith.constant 0 : index
    %c0_16 = arith.constant 0 : index
    %41 = vector.load %arg7[%c0_15, %c0_16] : memref<128x128xf32, #tpu.memory_space<vmem>>, vector<128x128xf32>
    %42 = arith.addf %41, %38 : vector<128x128xf32>
    %c0_17 = arith.constant 0 : index
    %c0_18 = arith.constant 0 : index
    %43 = vector.load %arg7[%c0_17, %c0_18] : memref<128x128xf32, #tpu.memory_space<vmem>>, vector<128x128xf32>
    tpu.vector_store %arg7[%c0_17, %c0_18], %42 {strides = array<i32>} : memref<128x128xf32, #tpu.memory_space<vmem>>, vector<128x128xf32>,
    %c0_19 = arith.constant 0 : index
    %c0_20 = arith.constant 0 : index
    %44 = vector.load %arg8[%c0_19, %c0_20] : memref<128x128xf32, #tpu.memory_space<vmem>>, vector<128x128xf32>
    %45 = arith.addf %44, %40 : vector<128x128xf32>
    %c0_21 = arith.constant 0 : index
    %c0_22 = arith.constant 0 : index
    %46 = vector.load %arg8[%c0_21, %c0_22] : memref<128x128xf32, #tpu.memory_space<vmem>>, vector<128x128xf32>
    tpu.vector_store %arg8[%c0_21, %c0_22], %45 {strides = array<i32>} : memref<128x128xf32, #tpu.memory_space<vmem>>, vector<128x128xf32>,
    %c0_i32_23 = arith.constant 0 : i32
    %47 = arith.cmpi eq, %arg1, %c0_i32_23 : i32
    %48 = arith.extui %47 : i1 to i32
    %c0_i32_24 = arith.constant 0 : i32
    %49 = arith.cmpi ne, %48, %c0_i32_24 : i32
    scf.if %49 {
      %c0_25 = arith.constant 0 : index
      %c0_26 = arith.constant 0 : index
      %50 = vector.load %arg7[%c0_25, %c0_26] : memref<128x128xf32, #tpu.memory_space<vmem>>, vector<128x128xf32>
      %cst_27 = arith.constant dense<0.000000e+00> : vector<128xf32>
      %51 = vector.multi_reduction <add>, %50, %cst_27 [1] : vector<128x128xf32> to vector<128xf32>
      %52 = vector.shape_cast %51 : vector<128xf32> to vector<128x1xf32>
      %c0_28 = arith.constant 0 : index
      %c0_29 = arith.constant 0 : index
      %53 = vector.load %arg8[%c0_28, %c0_29] : memref<128x128xf32, #tpu.memory_space<vmem>>, vector<128x128xf32>
      %cst_30 = arith.constant dense<0.000000e+00> : vector<128xf32>
      %54 = vector.multi_reduction <add>, %53, %cst_30 [1] : vector<128x128xf32> to vector<128xf32>
      %55 = vector.shape_cast %54 : vector<128xf32> to vector<128x1xf32>
      %cst_31 = arith.constant 1.000000e+00 : f32
      %56 = vector.broadcast %cst_31 : f32 to vector<128x1xf32>
      %57 = arith.addf %56, %52 : vector<128x1xf32>
      %58 = math.log %57 : vector<128x1xf32>
      %cst_32 = arith.constant 5.000000e-01 : f32
      %59 = vector.broadcast %cst_32 : f32 to vector<128x1xf32>
      %60 = arith.mulf %59, %58 : vector<128x1xf32>
      %cst_33 = arith.constant 1.000000e+00 : f32
      %61 = vector.broadcast %cst_33 : f32 to vector<128x1xf32>
      %62 = arith.addf %61, %55 : vector<128x1xf32>
      %63 = math.log %62 : vector<128x1xf32>
      %cst_34 = arith.constant 2.000000e-02 : f32
      %64 = vector.broadcast %cst_34 : f32 to vector<128x1xf32>
      %65 = arith.mulf %64, %63 : vector<128x1xf32>
      %66 = arith.addf %60, %65 : vector<128x1xf32>
      %67 = vector.shape_cast %66 : vector<128x1xf32> to vector<1x1x128xf32>
      %c0_35 = arith.constant 0 : index
      %c0_36 = arith.constant 0 : index
      %c0_37 = arith.constant 0 : index
      %68 = vector.load %arg6[%c0_35, %c0_36, %c0_37] : memref<1x1x128xf32, #tpu.memory_space<vmem>>, vector<1x1x128xf32>
      tpu.vector_store %arg6[%c0_35, %c0_36, %c0_37], %67 {strides = array<i32>} : memref<1x1x128xf32, #tpu.memory_space<vmem>>, vector<1x1x128xf32>,
    } else {
    }
    return
  }
  func.func @transform_0(%arg0: i32, %arg1: i32) -> (i32, i32) {
    %c0_i32 = arith.constant 0 : i32
    %c0_i32_0 = arith.constant 0 : i32
    return %arg0, %c0_i32 : i32, i32
  }
  func.func @transform_1(%arg0: i32, %arg1: i32) -> (i32, i32) {
    %c0_i32 = arith.constant 0 : i32
    %c0_i32_0 = arith.constant 0 : i32
    %c0_i32_1 = arith.constant 0 : i32
    return %c0_i32, %c0_i32_0 : i32, i32
  }
  func.func @transform_2(%arg0: i32, %arg1: i32) -> (i32, i32) {
    %c0_i32 = arith.constant 0 : i32
    %c0_i32_0 = arith.constant 0 : i32
    return %arg0, %c0_i32 : i32, i32
  }
  func.func @transform_3(%arg0: i32, %arg1: i32) -> (i32, i32) {
    %c0_i32 = arith.constant 0 : i32
    %c0_i32_0 = arith.constant 0 : i32
    return %c0_i32, %arg1 : i32, i32
  }
  func.func @transform_4(%arg0: i32, %arg1: i32) -> (i32, i32, i32) {
    %c0_i32 = arith.constant 0 : i32
    %c0_i32_0 = arith.constant 0 : i32
    %c0_i32_1 = arith.constant 0 : i32
    return %arg0, %c0_i32, %c0_i32_0 : i32, i32, i32
  }
}

</mosaic_0001>

<llo_original>
// kernel: tpu_custom_call.1
$region0: #{tpu_custom_call.1}
  #allocation0 [shape = 'u32[]', space=smem, size = 0x4, offset = 0x4, fixed_abs, tag = 'smem constant byte address 0x4 - core index']
  #allocation1 [shape = 'u32[144,128]{1,0:T(1,128)}', space=vmem, size = 0x12000, scoped, tag = 'internal scratch']
  #allocation2 [shape = 'f32[128,128]{1,0:T(8,128)}', space=vmem, size = 0x10000, scoped, tag = 'scratch operand']
  #allocation3 [shape = 'f32[128,128]{1,0:T(8,128)}', space=vmem, size = 0x10000, scoped, tag = 'scratch operand']
  %s0 = inlined_call_operand.vmem [shape: bf16[128,32], index: 0, kind: input, shape index: {}]
  %s1 = inlined_call_operand.vmem [shape: bf16[128,32], index: 1, kind: input, shape index: {}]
  %s2 = inlined_call_operand.vmem [shape: s32[128,1], index: 2, kind: input, shape index: {}]
  %s3 = inlined_call_operand.vmem [shape: s32[1,128], index: 3, kind: input, shape index: {}]
  %s4 = inlined_call_operand.hbm [shape: f32[1,1,128], index: 4, kind: output, shape index: {}]
  %s5 = sld [smem:[#allocation0]]
  $region34: #{tpu_custom_call.1} parent=0
    _
  %s7 = ssub.s32 1, %s5
  %s8 = scalar_select 0, %s7, %s5
  $region1: #{tpu_custom_call.1} parent=0
    #allocation4 [shape = 'u8[512]{0}', space=vmem, size = 0x400, scoped, tag = 'output window, operand 0, single buffered']
    #allocation5 [shape = 's32[1]{0}', space=sflag, size = 0x4, scoped, tag = 'scoped memory for tpu_custom_call.1']
    %9 = vsyncpa [#allocation5], 0
    // Predicated region
    $region2: #{tpu_custom_call.1} parent=1 // pred_check
      _
    $region3: #{tpu_custom_call.1} parent=1 // pred_check_branch
      %11 = sbr.rel (0) target = $region5
    $region4: #{tpu_custom_call.1} parent=1 // pred_region
      _
    $region5: #{tpu_custom_call.1} parent=1 // pred_fallthru
      _
    // Predicated region
    $region6: #{tpu_custom_call.1} parent=1 // pred_check
      _
    $region7: #{tpu_custom_call.1} parent=1 // pred_check_branch
      %13 = sbr.rel (0) target = $region9
    $region8: #{tpu_custom_call.1} parent=1 // pred_region
      _
    $region9: #{tpu_custom_call.1} parent=1 // pred_fallthru
      _
    // Predicated region
    $region10: #{tpu_custom_call.1} parent=1 // pred_check
      _
    $region11: #{tpu_custom_call.1} parent=1 // pred_check_branch
      %15 = sbr.rel (0) target = $region13
    $region12: #{tpu_custom_call.1} parent=1 // pred_region
      _
    $region13: #{tpu_custom_call.1} parent=1 // pred_fallthru
      _
    // Predicated region
    $region14: #{tpu_custom_call.1} parent=1 // pred_check
      _
    $region15: #{tpu_custom_call.1} parent=1 // pred_check_branch
      %17 = sbr.rel (0) target = $region17
    $region16: #{tpu_custom_call.1} parent=1 // pred_region
      _
    $region17: #{tpu_custom_call.1} parent=1 // pred_fallthru
      _
    %p19 = scmp.eq.s32.totalorder 0, 0
    // Predicated region
    $region18: #{tpu_custom_call.1} parent=1 // pred_check
      %p20 = pneg %p19
    $region19: #{tpu_custom_call.1} parent=1 // pred_check_branch
      %22 = sbr.rel (%p20) target = $region21
    $region20: #{tpu_custom_call.1} parent=1 // pred_region
      %23 = vst [vmem:[#allocation2] sm:$0xff] 0.0
      %24 = vst [vmem:[#allocation2 + $0x8] sm:$0xff] 0.0
      %25 = vst [vmem:[#allocation2 + $0x10] sm:$0xff] 0.0
      %26 = vst [vmem:[#allocation2 + $0x18] sm:$0xff] 0.0
      %27 = vst [vmem:[#allocation2 + $0x20] sm:$0xff] 0.0
      %28 = vst [vmem:[#allocation2 + $0x28] sm:$0xff] 0.0
      %29 = vst [vmem:[#allocation2 + $0x30] sm:$0xff] 0.0
      %30 = vst [vmem:[#allocation2 + $0x38] sm:$0xff] 0.0
      %31 = vst [vmem:[#allocation2 + $0x40] sm:$0xff] 0.0
      %32 = vst [vmem:[#allocation2 + $0x48] sm:$0xff] 0.0
      %33 = vst [vmem:[#allocation2 + $0x50] sm:$0xff] 0.0
      %34 = vst [vmem:[#allocation2 + $0x58] sm:$0xff] 0.0
      %35 = vst [vmem:[#allocation2 + $0x60] sm:$0xff] 0.0
      %36 = vst [vmem:[#allocation2 + $0x68] sm:$0xff] 0.0
      %37 = vst [vmem:[#allocation2 + $0x70] sm:$0xff] 0.0
      %38 = vst [vmem:[#allocation2 + $0x78] sm:$0xff] 0.0
      %39 = vst [vmem:[#allocation3] sm:$0xff] 0.0
      %40 = vst [vmem:[#allocation3 + $0x8] sm:$0xff] 0.0
      %41 = vst [vmem:[#allocation3 + $0x10] sm:$0xff] 0.0
      %42 = vst [vmem:[#allocation3 + $0x18] sm:$0xff] 0.0
      %43 = vst [vmem:[#allocation3 + $0x20] sm:$0xff] 0.0
      %44 = vst [vmem:[#allocation3 + $0x28] sm:$0xff] 0.0
      %45 = vst [vmem:[#allocation3 + $0x30] sm:$0xff] 0.0
      %46 = vst [vmem:[#allocation3 + $0x38] sm:$0xff] 0.0
      %47 = vst [vmem:[#allocation3 + $0x40] sm:$0xff] 0.0
      %48 = vst [vmem:[#allocation3 + $0x48] sm:$0xff] 0.0
      %49 = vst [vmem:[#allocation3 + $0x50] sm:$0xff] 0.0
      %50 = vst [vmem:[#allocation3 + $0x58] sm:$0xff] 0.0
      %51 = vst [vmem:[#allocation3 + $0x60] sm:$0xff] 0.0
      %52 = vst [vmem:[#allocation3 + $0x68] sm:$0xff] 0.0
      %53 = vst [vmem:[#allocation3 + $0x70] sm:$0xff] 0.0
      %54 = vst [vmem:[#allocation3 + $0x78] sm:$0xff] 0.0
    $region21: #{tpu_custom_call.1} parent=1 // pred_fallthru
      _
    %v55 = vld [vmem:[%s0] sm:$0xf]
    %v56 = vld [vmem:[%s0 + $0x4] sm:$0xf]
    %v57 = vld [vmem:[%s0 + $0x8] sm:$0xf]
    %v58 = vld [vmem:[%s0 + $0xc] sm:$0xf]
    %v59 = vld [vmem:[%s0 + $0x10] sm:$0xf]
    %v60 = vld [vmem:[%s0 + $0x14] sm:$0xf]
    %v61 = vld [vmem:[%s0 + $0x18] sm:$0xf]
    %v62 = vld [vmem:[%s0 + $0x1c] sm:$0xf]
    %v63 = vld [vmem:[%s0 + $0x20] sm:$0xf]
    %v64 = vld [vmem:[%s0 + $0x24] sm:$0xf]
    %v65 = vld [vmem:[%s0 + $0x28] sm:$0xf]
    %v66 = vld [vmem:[%s0 + $0x2c] sm:$0xf]
    %v67 = vld [vmem:[%s0 + $0x30] sm:$0xf]
    %v68 = vld [vmem:[%s0 + $0x34] sm:$0xf]
    %v69 = vld [vmem:[%s0 + $0x38] sm:$0xf]
    %v70 = vld [vmem:[%s0 + $0x3c] sm:$0xf]
    %s71 = smul.u32 0, 128
    %s72 = sshra.s32 %s71, 3
    %s73 = sand.u32 %s71, 7
    %s74 = smul.addr %s72, 4
    %s75 = scalar_lea.vmem %s1, %s74
    %v76 = vld [vmem:[%s75] sm:$0xf]
    %v77 = vld [vmem:[%s75 + $0x4] sm:$0xf]
    %v78 = vld [vmem:[%s75 + $0x8] sm:$0xf]
    %v79 = vld [vmem:[%s75 + $0xc] sm:$0xf]
    %v80 = vld [vmem:[%s75 + $0x10] sm:$0xf]
    %v81 = vld [vmem:[%s75 + $0x14] sm:$0xf]
    %v82 = vld [vmem:[%s75 + $0x18] sm:$0xf]
    %v83 = vld [vmem:[%s75 + $0x1c] sm:$0xf]
    %v84 = vld [vmem:[%s75 + $0x20] sm:$0xf]
    %v85 = vld [vmem:[%s75 + $0x24] sm:$0xf]
    %v86 = vld [vmem:[%s75 + $0x28] sm:$0xf]
    %v87 = vld [vmem:[%s75 + $0x2c] sm:$0xf]
    %v88 = vld [vmem:[%s75 + $0x30] sm:$0xf]
    %v89 = vld [vmem:[%s75 + $0x34] sm:$0xf]
    %v90 = vld [vmem:[%s75 + $0x38] sm:$0xf]
    %v91 = vld [vmem:[%s75 + $0x3c] sm:$0xf]
    %v108 = vunpack.c.l.b16 %v55
    %v109 = vunpack.c.l.b16 %v56
    %v110 = vunpack.c.l.b16 %v57
    %v111 = vunpack.c.l.b16 %v58
    %v112 = vunpack.c.l.b16 %v59
    %v113 = vunpack.c.l.b16 %v60
    %v114 = vunpack.c.l.b16 %v61
    %v115 = vunpack.c.l.b16 %v62
    %v116 = vunpack.c.l.b16 %v63
    %v117 = vunpack.c.l.b16 %v64
    %v118 = vunpack.c.l.b16 %v65
    %v119 = vunpack.c.l.b16 %v66
    %v120 = vunpack.c.l.b16 %v67
    %v121 = vunpack.c.l.b16 %v68
    %v122 = vunpack.c.l.b16 %v69
    %v123 = vunpack.c.l.b16 %v70
    %v124 = vpack.c.b16 %v109, %v108
    %v125 = vpack.c.b16 %v111, %v110
    %v126 = vpack.c.b16 %v113, %v112
    %v127 = vpack.c.b16 %v115, %v114
    %v128 = vpack.c.b16 %v117, %v116
    %v129 = vpack.c.b16 %v119, %v118
    %v130 = vpack.c.b16 %v121, %v120
    %v131 = vpack.c.b16 %v123, %v122
    %v148 = vunpack.c.l.b16 %v76
    %v149 = vunpack.c.l.b16 %v77
    %v150 = vunpack.c.l.b16 %v78
    %v151 = vunpack.c.l.b16 %v79
    %v152 = vunpack.c.l.b16 %v80
    %v153 = vunpack.c.l.b16 %v81
    %v154 = vunpack.c.l.b16 %v82
    %v155 = vunpack.c.l.b16 %v83
    %v156 = vunpack.c.l.b16 %v84
    %v157 = vunpack.c.l.b16 %v85
    %v158 = vunpack.c.l.b16 %v86
    %v159 = vunpack.c.l.b16 %v87
    %v160 = vunpack.c.l.b16 %v88
    %v161 = vunpack.c.l.b16 %v89
    %v162 = vunpack.c.l.b16 %v90
    %v163 = vunpack.c.l.b16 %v91
    %v164 = vpack.c.b16 %v149, %v148
    %v165 = vpack.c.b16 %v151, %v150
    %v166 = vpack.c.b16 %v153, %v152
    %v167 = vpack.c.b16 %v155, %v154
    %v168 = vpack.c.b16 %v157, %v156
    %v169 = vpack.c.b16 %v159, %v158
    %v170 = vpack.c.b16 %v161, %v160
    %v171 = vpack.c.b16 %v163, %v162
    %vm172 = vcmask 261120
    %v174 = vsel %vm172, %v124, 0
    %v177 = vsel %vm172, %v125, 0
    %v180 = vsel %vm172, %v126, 0
    %v183 = vsel %vm172, %v127, 0
    %v186 = vsel %vm172, %v128, 0
    %v189 = vsel %vm172, %v129, 0
    %v192 = vsel %vm172, %v130, 0
    %v195 = vsel %vm172, %v131, 0
    %v198 = vsel %vm172, %v164, 0
    %v201 = vsel %vm172, %v165, 0
    %v204 = vsel %vm172, %v166, 0
    %v207 = vsel %vm172, %v167, 0
    %v210 = vsel %vm172, %v168, 0
    %v213 = vsel %vm172, %v169, 0
    %v216 = vsel %vm172, %v170, 0
    %v219 = vsel %vm172, %v171, 0
    %221 = vmatprep.subr.bf16.mxu0 0
    %222 = vmatpush1.bf16.xpose.msra.mxu0 %v219
    %223 = vmatprep.subr.bf16.mxu0 0
    %224 = vmatpush1.bf16.xpose.msra.mxu0 %v216
    %225 = vmatprep.subr.bf16.mxu0 0
    %226 = vmatpush1.bf16.xpose.msra.mxu0 %v213
    %227 = vmatprep.subr.bf16.mxu0 0
    %228 = vmatpush1.bf16.xpose.msra.mxu0 %v210
    %229 = vmatprep.subr.bf16.mxu0 0
    %230 = vmatpush1.bf16.xpose.msra.mxu0 %v207
    %231 = vmatprep.subr.bf16.mxu0 0
    %232 = vmatpush1.bf16.xpose.msra.mxu0 %v204
    %233 = vmatprep.subr.bf16.mxu0 0
    %234 = vmatpush1.bf16.xpose.msra.mxu0 %v201
    %235 = vmatprep.subr.bf16.mxu0 0
    %236 = vmatpush1.bf16.xpose.msra.mxu0 %v198
    %237 = vmatprep.subr.bf16.mxu0 0
    %238 = vmatpush2.bf16.xpose.msra.mxu0 0
    %239 = vmatprep.subr.bf16.mxu0 0
    %240 = vmatpush2.bf16.xpose.msra.mxu0 0
    %241 = vmatprep.subr.bf16.mxu0 0
    %242 = vmatpush2.bf16.xpose.msra.mxu0 0
    %243 = vmatprep.subr.bf16.mxu0 0
    %244 = vmatpush2.bf16.xpose.msra.mxu0 0
    %245 = vmatprep.subr.bf16.mxu0 0
    %246 = vmatpush2.bf16.xpose.msra.mxu0 0
    %247 = vmatprep.subr.bf16.mxu0 0
    %248 = vmatpush2.bf16.xpose.msra.mxu0 0
    %249 = vmatprep.subr.bf16.mxu0 0
    %250 = vmatpush2.bf16.xpose.msra.mxu0 0
    %251 = vmatprep.subr.bf16.mxu0 0
    %252 = vmatpush2.bf16.xpose.msra.mxu0 0
    %253 = vmatprep.mubr.bf16.mxu0 0
    %254 = vmatmul.mubr.bf16.gmra.mxu0 %v174
    %v255 = vpop.f32.mrf.mxu0
    %v256 = vadd.f32 0.0, %v255
    %v257 = vpop.f32.mrf.mxu0
    %v258 = vpop.f32.mrf.mxu0
    %v259 = vadd.f32 0.0, %v258
    %v260 = vpop.f32.mrf.mxu0
    %261 = vmatprep.mubr.bf16.mxu0 0
    %262 = vmatmul.mubr.bf16.gmra.mxu0 %v177
    %v263 = vpop.f32.mrf.mxu0
    %v264 = vadd.f32 0.0, %v263
    %v265 = vpop.f32.mrf.mxu0
    %v266 = vpop.f32.mrf.mxu0
    %v267 = vadd.f32 0.0, %v266
    %v268 = vpop.f32.mrf.mxu0
    %269 = vmatprep.mubr.bf16.mxu0 0
    %270 = vmatmul.mubr.bf16.gmra.mxu0 %v180
    %v271 = vpop.f32.mrf.mxu0
    %v272 = vadd.f32 0.0, %v271
    %v273 = vpop.f32.mrf.mxu0
    %v274 = vpop.f32.mrf.mxu0
    %v275 = vadd.f32 0.0, %v274
    %v276 = vpop.f32.mrf.mxu0
    %277 = vmatprep.mubr.bf16.mxu0 0
    %278 = vmatmul.mubr.bf16.gmra.mxu0 %v183
    %v279 = vpop.f32.mrf.mxu0
    %v280 = vadd.f32 0.0, %v279
    %v281 = vpop.f32.mrf.mxu0
    %v282 = vpop.f32.mrf.mxu0
    %v283 = vadd.f32 0.0, %v282
    %v284 = vpop.f32.mrf.mxu0
    %285 = vmatprep.mubr.bf16.mxu0 0
    %286 = vmatmul.mubr.bf16.gmra.mxu0 %v186
    %v287 = vpop.f32.mrf.mxu0
    %v288 = vadd.f32 0.0, %v287
    %v289 = vpop.f32.mrf.mxu0
    %v290 = vpop.f32.mrf.mxu0
    %v291 = vadd.f32 0.0, %v290
    %v292 = vpop.f32.mrf.mxu0
    %293 = vmatprep.mubr.bf16.mxu0 0
    %294 = vmatmul.mubr.bf16.gmra.mxu0 %v189
    %v295 = vpop.f32.mrf.mxu0
    %v296 = vadd.f32 0.0, %v295
    %v297 = vpop.f32.mrf.mxu0
    %v298 = vpop.f32.mrf.mxu0
    %v299 = vadd.f32 0.0, %v298
    %v300 = vpop.f32.mrf.mxu0
    %301 = vmatprep.mubr.bf16.mxu0 0
    %302 = vmatmul.mubr.bf16.gmra.mxu0 %v192
    %v303 = vpop.f32.mrf.mxu0
    %v304 = vadd.f32 0.0, %v303
    %v305 = vpop.f32.mrf.mxu0
    %v306 = vpop.f32.mrf.mxu0
    %v307 = vadd.f32 0.0, %v306
    %v308 = vpop.f32.mrf.mxu0
    %309 = vmatprep.mubr.bf16.mxu0 0
    %310 = vmatmul.mubr.bf16.gmra.mxu0 %v195
    %v311 = vpop.f32.mrf.mxu0
    %v312 = vadd.f32 0.0, %v311
    %v313 = vpop.f32.mrf.mxu0
    %v314 = vpop.f32.mrf.mxu0
    %v315 = vadd.f32 0.0, %v314
    %v316 = vpop.f32.mrf.mxu0
    %317 = vdwg.mxu0
    %v318 = vld [vmem:[%s2] sm:$0xff]
    %v319 = vld [vmem:[%s2 + $0x8] sm:$0xff]
    %v320 = vld [vmem:[%s2 + $0x10] sm:$0xff]
    %v321 = vld [vmem:[%s2 + $0x18] sm:$0xff]
    %v322 = vld [vmem:[%s2 + $0x20] sm:$0xff]
    %v323 = vld [vmem:[%s2 + $0x28] sm:$0xff]
    %v324 = vld [vmem:[%s2 + $0x30] sm:$0xff]
    %v325 = vld [vmem:[%s2 + $0x38] sm:$0xff]
    %v326 = vld [vmem:[%s2 + $0x40] sm:$0xff]
    %v327 = vld [vmem:[%s2 + $0x48] sm:$0xff]
    %v328 = vld [vmem:[%s2 + $0x50] sm:$0xff]
    %v329 = vld [vmem:[%s2 + $0x58] sm:$0xff]
    %v330 = vld [vmem:[%s2 + $0x60] sm:$0xff]
    %v331 = vld [vmem:[%s2 + $0x68] sm:$0xff]
    %v332 = vld [vmem:[%s2 + $0x70] sm:$0xff]
    %v333 = vld [vmem:[%s2 + $0x78] sm:$0xff]
    %v334 = vld [vmem:[%s3] sm:$0x1]
    %335 = vset.pattern.permute.xlu0 0
    %336 = vperm.xlu0 %335, %v318
    %v337 = vpop.permute.xlu0 %336
    %338 = vset.pattern.permute.xlu0 0
    %339 = vperm.xlu0 %338, %v319
    %v340 = vpop.permute.xlu0 %339
    %341 = vset.pattern.permute.xlu0 0
    %342 = vperm.xlu0 %341, %v320
    %v343 = vpop.permute.xlu0 %342
    %344 = vset.pattern.permute.xlu0 0
    %345 = vperm.xlu0 %344, %v321
    %v346 = vpop.permute.xlu0 %345
    %347 = vset.pattern.permute.xlu0 0
    %348 = vperm.xlu0 %347, %v322
    %v349 = vpop.permute.xlu0 %348
    %350 = vset.pattern.permute.xlu0 0
    %351 = vperm.xlu0 %350, %v323
    %v352 = vpop.permute.xlu0 %351
    %353 = vset.pattern.permute.xlu0 0
    %354 = vperm.xlu0 %353, %v324
    %v355 = vpop.permute.xlu0 %354
    %356 = vset.pattern.permute.xlu0 0
    %357 = vperm.xlu0 %356, %v325
    %v358 = vpop.permute.xlu0 %357
    %359 = vset.pattern.permute.xlu0 0
    %360 = vperm.xlu0 %359, %v326
    %v361 = vpop.permute.xlu0 %360
    %362 = vset.pattern.permute.xlu0 0
    %363 = vperm.xlu0 %362, %v327
    %v364 = vpop.permute.xlu0 %363
    %365 = vset.pattern.permute.xlu0 0
    %366 = vperm.xlu0 %365, %v328
    %v367 = vpop.permute.xlu0 %366
    %368 = vset.pattern.permute.xlu0 0
    %369 = vperm.xlu0 %368, %v329
    %v370 = vpop.permute.xlu0 %369
    %371 = vset.pattern.permute.xlu0 0
    %372 = vperm.xlu0 %371, %v330
    %v373 = vpop.permute.xlu0 %372
    %374 = vset.pattern.permute.xlu0 0
    %375 = vperm.xlu0 %374, %v331
    %v376 = vpop.permute.xlu0 %375
    %377 = vset.pattern.permute.xlu0 0
    %378 = vperm.xlu0 %377, %v332
    %v379 = vpop.permute.xlu0 %378
    %380 = vset.pattern.permute.xlu0 0
    %381 = vperm.xlu0 %380, %v333
    %v382 = vpop.permute.xlu0 %381
    %v383 = vlaneseq
    %v384 = vshrl.u32 %v383, 7
    %v385 = vsub.s32 0, %v384
    %v386 = vrot.slane %v334, %v385
    %vm387 = vcmp.eq.s32.totalorder %v337, %v386
    %vm388 = vcmp.eq.s32.totalorder %v340, %v386
    %vm389 = vcmp.eq.s32.totalorder %v343, %v386
    %vm390 = vcmp.eq.s32.totalorder %v346, %v386
    %vm391 = vcmp.eq.s32.totalorder %v349, %v386
    %vm392 = vcmp.eq.s32.totalorder %v352, %v386
    %vm393 = vcmp.eq.s32.totalorder %v355, %v386
    %vm394 = vcmp.eq.s32.totalorder %v358, %v386
    %vm395 = vcmp.eq.s32.totalorder %v361, %v386
    %vm396 = vcmp.eq.s32.totalorder %v364, %v386
    %vm397 = vcmp.eq.s32.totalorder %v367, %v386
    %vm398 = vcmp.eq.s32.totalorder %v370, %v386
    %vm399 = vcmp.eq.s32.totalorder %v373, %v386
    %vm400 = vcmp.eq.s32.totalorder %v376, %v386
    %vm401 = vcmp.eq.s32.totalorder %v379, %v386
    %vm402 = vcmp.eq.s32.totalorder %v382, %v386
    %v403 = vsel %vm387, -2.0, 50.0
    %v404 = vsel %vm388, -2.0, 50.0
    %v405 = vsel %vm389, -2.0, 50.0
    %v406 = vsel %vm390, -2.0, 50.0
    %v407 = vsel %vm391, -2.0, 50.0
    %v408 = vsel %vm392, -2.0, 50.0
    %v409 = vsel %vm393, -2.0, 50.0
    %v410 = vsel %vm394, -2.0, 50.0
    %v411 = vsel %vm395, -2.0, 50.0
    %v412 = vsel %vm396, -2.0, 50.0
    %v413 = vsel %vm397, -2.0, 50.0
    %v414 = vsel %vm398, -2.0, 50.0
    %v415 = vsel %vm399, -2.0, 50.0
    %v416 = vsel %vm400, -2.0, 50.0
    %v417 = vsel %vm401, -2.0, 50.0
    %v418 = vsel %vm402, -2.0, 50.0
    %v419 = vsub.f32 %v256, 0.5
    %v420 = vsub.f32 %v259, 0.5
    %v421 = vsub.f32 %v264, 0.5
    %v422 = vsub.f32 %v267, 0.5
    %v423 = vsub.f32 %v272, 0.5
    %v424 = vsub.f32 %v275, 0.5
    %v425 = vsub.f32 %v280, 0.5
    %v426 = vsub.f32 %v283, 0.5
    %v427 = vsub.f32 %v288, 0.5
    %v428 = vsub.f32 %v291, 0.5
    %v429 = vsub.f32 %v296, 0.5
    %v430 = vsub.f32 %v299, 0.5
    %v431 = vsub.f32 %v304, 0.5
    %v432 = vsub.f32 %v307, 0.5
    %v433 = vsub.f32 %v312, 0.5
    %v434 = vsub.f32 %v315, 0.5
    %v435 = vmul.f32 %v403, %v419
    %v436 = vmul.f32 %v404, %v420
    %v437 = vmul.f32 %v405, %v421
    %v438 = vmul.f32 %v406, %v422
    %v439 = vmul.f32 %v407, %v423
    %v440 = vmul.f32 %v408, %v424
    %v441 = vmul.f32 %v409, %v425
    %v442 = vmul.f32 %v410, %v426
    %v443 = vmul.f32 %v411, %v427
    %v444 = vmul.f32 %v412, %v428
    %v445 = vmul.f32 %v413, %v429
    %v446 = vmul.f32 %v414, %v430
    %v447 = vmul.f32 %v415, %v431
    %v448 = vmul.f32 %v416, %v432
    %v449 = vmul.f32 %v417, %v433
    %v450 = vmul.f32 %v418, %v434
    %v451 = vmul.f32 %v435, 1.442695
    %v452 = vpow.pop %v451
    %v453 = vmul.f32 %v436, 1.442695
    %v454 = vpow.pop %v453
    %v455 = vmul.f32 %v437, 1.442695
    %v456 = vpow.pop %v455
    %v457 = vmul.f32 %v438, 1.442695
    %v458 = vpow.pop %v457
    %v459 = vmul.f32 %v439, 1.442695
    %v460 = vpow.pop %v459
    %v461 = vmul.f32 %v440, 1.442695
    %v462 = vpow.pop %v461
    %v463 = vmul.f32 %v441, 1.442695
    %v464 = vpow.pop %v463
    %v465 = vmul.f32 %v442, 1.442695
    %v466 = vpow.pop %v465
    %v467 = vmul.f32 %v443, 1.442695
    %v468 = vpow.pop %v467
    %v469 = vmul.f32 %v444, 1.442695
    %v470 = vpow.pop %v469
    %v471 = vmul.f32 %v445, 1.442695
    %v472 = vpow.pop %v471
    %v473 = vmul.f32 %v446, 1.442695
    %v474 = vpow.pop %v473
    %v475 = vmul.f32 %v447, 1.442695
    %v476 = vpow.pop %v475
    %v477 = vmul.f32 %v448, 1.442695
    %v478 = vpow.pop %v477
    %v479 = vmul.f32 %v449, 1.442695
    %v480 = vpow.pop %v479
    %v481 = vmul.f32 %v450, 1.442695
    %v482 = vpow.pop %v481
    %v483 = vlaneseq
    %v484 = vshrl.u32 %v483, 7
    %v485 = vadd.s32 %v484, 8
    %v486 = vadd.s32 %v484, 16
    %v487 = vadd.s32 %v484, 24
    %v488 = vadd.s32 %v484, 32
    %v489 = vadd.s32 %v484, 40
    %v490 = vadd.s32 %v484, 48
    %v491 = vadd.s32 %v484, 56
    %v492 = vadd.s32 %v484, 64
    %v493 = vadd.s32 %v484, 72
    %v494 = vadd.s32 %v484, 80
    %v495 = vadd.s32 %v484, 88
    %v496 = vadd.s32 %v484, 96
    %v497 = vadd.s32 %v484, 104
    %v498 = vadd.s32 %v484, 112
    %v499 = vadd.s32 %v484, 120
    %v500 = vlaneseq
    %v501 = vand.u32 %v500, 127
    %vm502 = vcmp.eq.s32.totalorder %v484, %v501
    %vm503 = vcmp.eq.s32.totalorder %v485, %v501
    %vm504 = vcmp.eq.s32.totalorder %v486, %v501
    %vm505 = vcmp.eq.s32.totalorder %v487, %v501
    %vm506 = vcmp.eq.s32.totalorder %v488, %v501
    %vm507 = vcmp.eq.s32.totalorder %v489, %v501
    %vm508 = vcmp.eq.s32.totalorder %v490, %v501
    %vm509 = vcmp.eq.s32.totalorder %v491, %v501
    %vm510 = vcmp.eq.s32.totalorder %v492, %v501
    %vm511 = vcmp.eq.s32.totalorder %v493, %v501
    %vm512 = vcmp.eq.s32.totalorder %v494, %v501
    %vm513 = vcmp.eq.s32.totalorder %v495, %v501
    %vm514 = vcmp.eq.s32.totalorder %v496, %v501
    %vm515 = vcmp.eq.s32.totalorder %v497, %v501
    %vm516 = vcmp.eq.s32.totalorder %v498, %v501
    %vm517 = vcmp.eq.s32.totalorder %v499, %v501
    %p518 = scmp.eq.s32.totalorder 0, 0
    %s519 = scalar_select %p518, 1, 0
    %v520 = vstv %s519
    %vm521 = vcmp.eq.s32.totalorder %v520, 1
    %vm522 = vmand %vm502, %vm521
    %vm523 = vmand %vm503, %vm521
    %vm524 = vmand %vm504, %vm521
    %vm525 = vmand %vm505, %vm521
    %vm526 = vmand %vm506, %vm521
    %vm527 = vmand %vm507, %vm521
    %vm528 = vmand %vm508, %vm521
    %vm529 = vmand %vm509, %vm521
    %vm530 = vmand %vm510, %vm521
    %vm531 = vmand %vm511, %vm521
    %vm532 = vmand %vm512, %vm521
    %vm533 = vmand %vm513, %vm521
    %vm534 = vmand %vm514, %vm521
    %vm535 = vmand %vm515, %vm521
    %vm536 = vmand %vm516, %vm521
    %vm537 = vmand %vm517, %vm521
    %vm538 = vmxor %vm522, 1
    %vm539 = vmxor %vm523, 1
    %vm540 = vmxor %vm524, 1
    %vm541 = vmxor %vm525, 1
    %vm542 = vmxor %vm526, 1
    %vm543 = vmxor %vm527, 1
    %vm544 = vmxor %vm528, 1
    %vm545 = vmxor %vm529, 1
    %vm546 = vmxor %vm530, 1
    %vm547 = vmxor %vm531, 1
    %vm548 = vmxor %vm532, 1
    %vm549 = vmxor %vm533, 1
    %vm550 = vmxor %vm534, 1
    %vm551 = vmxor %vm535, 1
    %vm552 = vmxor %vm536, 1
    %vm553 = vmxor %vm537, 1
    %vm554 = vmand %vm387, %vm538
    %vm555 = vmand %vm388, %vm539
    %vm556 = vmand %vm389, %vm540
    %vm557 = vmand %vm390, %vm541
    %vm558 = vmand %vm391, %vm542
    %vm559 = vmand %vm392, %vm543
    %vm560 = vmand %vm393, %vm544
    %vm561 = vmand %vm394, %vm545
    %vm562 = vmand %vm395, %vm546
    %vm563 = vmand %vm396, %vm547
    %vm564 = vmand %vm397, %vm548
    %vm565 = vmand %vm398, %vm549
    %vm566 = vmand %vm399, %vm550
    %vm567 = vmand %vm400, %vm551
    %vm568 = vmand %vm401, %vm552
    %vm569 = vmand %vm402, %vm553
    %vm570 = vmxor %vm387, 1
    %vm571 = vmxor %vm388, 1
    %vm572 = vmxor %vm389, 1
    %vm573 = vmxor %vm390, 1
    %vm574 = vmxor %vm391, 1
    %vm575 = vmxor %vm392, 1
    %vm576 = vmxor %vm393, 1
    %vm577 = vmxor %vm394, 1
    %vm578 = vmxor %vm395, 1
    %vm579 = vmxor %vm396, 1
    %vm580 = vmxor %vm397, 1
    %vm581 = vmxor %vm398, 1
    %vm582 = vmxor %vm399, 1
    %vm583 = vmxor %vm400, 1
    %vm584 = vmxor %vm401, 1
    %vm585 = vmxor %vm402, 1
    %v586 = vstv %s71
    %v587 = vadd.s32 %v586, %v501
    %vm588 = vcmp.lt.s32.totalorder %v587, 8
    %vm589 = vmand %vm554, %vm588
    %vm590 = vmand %vm555, %vm588
    %vm591 = vmand %vm556, %vm588
    %vm592 = vmand %vm557, %vm588
    %vm593 = vmand %vm558, %vm588
    %vm594 = vmand %vm559, %vm588
    %vm595 = vmand %vm560, %vm588
    %vm596 = vmand %vm561, %vm588
    %vm597 = vmand %vm562, %vm588
    %vm598 = vmand %vm563, %vm588
    %vm599 = vmand %vm564, %vm588
    %vm600 = vmand %vm565, %vm588
    %vm601 = vmand %vm566, %vm588
    %vm602 = vmand %vm567, %vm588
    %vm603 = vmand %vm568, %vm588
    %vm604 = vmand %vm569, %vm588
    %vm605 = vmand %vm570, %vm588
    %vm606 = vmand %vm571, %vm588
    %vm607 = vmand %vm572, %vm588
    %vm608 = vmand %vm573, %vm588
    %vm609 = vmand %vm574, %vm588
    %vm610 = vmand %vm575, %vm588
    %vm611 = vmand %vm576, %vm588
    %vm612 = vmand %vm577, %vm588
    %vm613 = vmand %vm578, %vm588
    %vm614 = vmand %vm579, %vm588
    %vm615 = vmand %vm580, %vm588
    %vm616 = vmand %vm581, %vm588
    %vm617 = vmand %vm582, %vm588
    %vm618 = vmand %vm583, %vm588
    %vm619 = vmand %vm584, %vm588
    %vm620 = vmand %vm585, %vm588
    %v621 = vsel %vm589, %v452, 0.0
    %v622 = vsel %vm590, %v454, 0.0
    %v623 = vsel %vm591, %v456, 0.0
    %v624 = vsel %vm592, %v458, 0.0
    %v625 = vsel %vm593, %v460, 0.0
    %v626 = vsel %vm594, %v462, 0.0
    %v627 = vsel %vm595, %v464, 0.0
    %v628 = vsel %vm596, %v466, 0.0
    %v629 = vsel %vm597, %v468, 0.0
    %v630 = vsel %vm598, %v470, 0.0
    %v631 = vsel %vm599, %v472, 0.0
    %v632 = vsel %vm600, %v474, 0.0
    %v633 = vsel %vm601, %v476, 0.0
    %v634 = vsel %vm602, %v478, 0.0
    %v635 = vsel %vm603, %v480, 0.0
    %v636 = vsel %vm604, %v482, 0.0
    %v637 = vsel %vm605, %v452, 0.0
    %v638 = vsel %vm606, %v454, 0.0
    %v639 = vsel %vm607, %v456, 0.0
    %v640 = vsel %vm608, %v458, 0.0
    %v641 = vsel %vm609, %v460, 0.0
    %v642 = vsel %vm610, %v462, 0.0
    %v643 = vsel %vm611, %v464, 0.0
    %v644 = vsel %vm612, %v466, 0.0
    %v645 = vsel %vm613, %v468, 0.0
    %v646 = vsel %vm614, %v470, 0.0
    %v647 = vsel %vm615, %v472, 0.0
    %v648 = vsel %vm616, %v474, 0.0
    %v649 = vsel %vm617, %v476, 0.0
    %v650 = vsel %vm618, %v478, 0.0
    %v651 = vsel %vm619, %v480, 0.0
    %v652 = vsel %vm620, %v482, 0.0
    %v653 = vld [vmem:[#allocation2] sm:$0xff]
    %v654 = vld [vmem:[#allocation2 + $0x8] sm:$0xff]
    %v655 = vld [vmem:[#allocation2 + $0x10] sm:$0xff]
    %v656 = vld [vmem:[#allocation2 + $0x18] sm:$0xff]
    %v657 = vld [vmem:[#allocation2 + $0x20] sm:$0xff]
    %v658 = vld [vmem:[#allocation2 + $0x28] sm:$0xff]
    %v659 = vld [vmem:[#allocation2 + $0x30] sm:$0xff]
    %v660 = vld [vmem:[#allocation2 + $0x38] sm:$0xff]
    %v661 = vld [vmem:[#allocation2 + $0x40] sm:$0xff]
    %v662 = vld [vmem:[#allocation2 + $0x48] sm:$0xff]
    %v663 = vld [vmem:[#allocation2 + $0x50] sm:$0xff]
    %v664 = vld [vmem:[#allocation2 + $0x58] sm:$0xff]
    %v665 = vld [vmem:[#allocation2 + $0x60] sm:$0xff]
    %v666 = vld [vmem:[#allocation2 + $0x68] sm:$0xff]
    %v667 = vld [vmem:[#allocation2 + $0x70] sm:$0xff]
    %v668 = vld [vmem:[#allocation2 + $0x78] sm:$0xff]
    %v669 = vadd.f32 %v653, %v621
    %v670 = vadd.f32 %v654, %v622
    %v671 = vadd.f32 %v655, %v623
    %v672 = vadd.f32 %v656, %v624
    %v673 = vadd.f32 %v657, %v625
    %v674 = vadd.f32 %v658, %v626
    %v675 = vadd.f32 %v659, %v627
    %v676 = vadd.f32 %v660, %v628
    %v677 = vadd.f32 %v661, %v629
    %v678 = vadd.f32 %v662, %v630
    %v679 = vadd.f32 %v663, %v631
    %v680 = vadd.f32 %v664, %v632
    %v681 = vadd.f32 %v665, %v633
    %v682 = vadd.f32 %v666, %v634
    %v683 = vadd.f32 %v667, %v635
    %v684 = vadd.f32 %v668, %v636
    %685 = vst [vmem:[#allocation2] sm:$0xff] %v669
    %686 = vst [vmem:[#allocation2 + $0x8] sm:$0xff] %v670
    %687 = vst [vmem:[#allocation2 + $0x10] sm:$0xff] %v671
    %688 = vst [vmem:[#allocation2 + $0x18] sm:$0xff] %v672
    %689 = vst [vmem:[#allocation2 + $0x20] sm:$0xff] %v673
    %690 = vst [vmem:[#allocation2 + $0x28] sm:$0xff] %v674
    %691 = vst [vmem:[#allocation2 + $0x30] sm:$0xff] %v675
    %692 = vst [vmem:[#allocation2 + $0x38] sm:$0xff] %v676
    %693 = vst [vmem:[#allocation2 + $0x40] sm:$0xff] %v677
    %694 = vst [vmem:[#allocation2 + $0x48] sm:$0xff] %v678
    %695 = vst [vmem:[#allocation2 + $0x50] sm:$0xff] %v679
    %696 = vst [vmem:[#allocation2 + $0x58] sm:$0xff] %v680
    %697 = vst [vmem:[#allocation2 + $0x60] sm:$0xff] %v681
    %698 = vst [vmem:[#allocation2 + $0x68] sm:$0xff] %v682
    %699 = vst [vmem:[#allocation2 + $0x70] sm:$0xff] %v683
    %700 = vst [vmem:[#allocation2 + $0x78] sm:$0xff] %v684
    %v701 = vld [vmem:[#allocation3] sm:$0xff]
    %v702 = vld [vmem:[#allocation3 + $0x8] sm:$0xff]
    %v703 = vld [vmem:[#allocation3 + $0x10] sm:$0xff]
    %v704 = vld [vmem:[#allocation3 + $0x18] sm:$0xff]
    %v705 = vld [vmem:[#allocation3 + $0x20] sm:$0xff]
    %v706 = vld [vmem:[#allocation3 + $0x28] sm:$0xff]
    %v707 = vld [vmem:[#allocation3 + $0x30] sm:$0xff]
    %v708 = vld [vmem:[#allocation3 + $0x38] sm:$0xff]
    %v709 = vld [vmem:[#allocation3 + $0x40] sm:$0xff]
    %v710 = vld [vmem:[#allocation3 + $0x48] sm:$0xff]
    %v711 = vld [vmem:[#allocation3 + $0x50] sm:$0xff]
    %v712 = vld [vmem:[#allocation3 + $0x58] sm:$0xff]
    %v713 = vld [vmem:[#allocation3 + $0x60] sm:$0xff]
    %v714 = vld [vmem:[#allocation3 + $0x68] sm:$0xff]
    %v715 = vld [vmem:[#allocation3 + $0x70] sm:$0xff]
    %v716 = vld [vmem:[#allocation3 + $0x78] sm:$0xff]
    %v717 = vadd.f32 %v701, %v637
    %v718 = vadd.f32 %v702, %v638
    %v719 = vadd.f32 %v703, %v639
    %v720 = vadd.f32 %v704, %v640
    %v721 = vadd.f32 %v705, %v641
    %v722 = vadd.f32 %v706, %v642
    %v723 = vadd.f32 %v707, %v643
    %v724 = vadd.f32 %v708, %v644
    %v725 = vadd.f32 %v709, %v645
    %v726 = vadd.f32 %v710, %v646
    %v727 = vadd.f32 %v711, %v647
    %v728 = vadd.f32 %v712, %v648
    %v729 = vadd.f32 %v713, %v649
    %v730 = vadd.f32 %v714, %v650
    %v731 = vadd.f32 %v715, %v651
    %v732 = vadd.f32 %v716, %v652
    %733 = vst [vmem:[#allocation3] sm:$0xff] %v717
    %734 = vst [vmem:[#allocation3 + $0x8] sm:$0xff] %v718
    %735 = vst [vmem:[#allocation3 + $0x10] sm:$0xff] %v719
    %736 = vst [vmem:[#allocation3 + $0x18] sm:$0xff] %v720
    %737 = vst [vmem:[#allocation3 + $0x20] sm:$0xff] %v721
    %738 = vst [vmem:[#allocation3 + $0x28] sm:$0xff] %v722
    %739 = vst [vmem:[#allocation3 + $0x30] sm:$0xff] %v723
    %740 = vst [vmem:[#allocation3 + $0x38] sm:$0xff] %v724
    %741 = vst [vmem:[#allocation3 + $0x40] sm:$0xff] %v725
    %742 = vst [vmem:[#allocation3 + $0x48] sm:$0xff] %v726
    %743 = vst [vmem:[#allocation3 + $0x50] sm:$0xff] %v727
    %744 = vst [vmem:[#allocation3 + $0x58] sm:$0xff] %v728
    %745 = vst [vmem:[#allocation3 + $0x60] sm:$0xff] %v729
    %746 = vst [vmem:[#allocation3 + $0x68] sm:$0xff] %v730
    %747 = vst [vmem:[#allocation3 + $0x70] sm:$0xff] %v731
    %748 = vst [vmem:[#allocation3 + $0x78] sm:$0xff] %v732
    // Predicated region
    $region22: #{tpu_custom_call.1} parent=1 // pred_check
      %p749 = pneg %p19
    $region23: #{tpu_custom_call.1} parent=1 // pred_check_branch
      %751 = sbr.rel (%p749) target = $region25
    $region24: #{tpu_custom_call.1} parent=1 // pred_region
      %v752 = vld [vmem:[#allocation2] sm:$0xff]
      %v753 = vld [vmem:[#allocation2 + $0x8] sm:$0xff]
      %v754 = vld [vmem:[#allocation2 + $0x10] sm:$0xff]
      %v755 = vld [vmem:[#allocation2 + $0x18] sm:$0xff]
      %v756 = vld [vmem:[#allocation2 + $0x20] sm:$0xff]
      %v757 = vld [vmem:[#allocation2 + $0x28] sm:$0xff]
      %v758 = vld [vmem:[#allocation2 + $0x30] sm:$0xff]
      %v759 = vld [vmem:[#allocation2 + $0x38] sm:$0xff]
      %v760 = vld [vmem:[#allocation2 + $0x40] sm:$0xff]
      %v761 = vld [vmem:[#allocation2 + $0x48] sm:$0xff]
      %v762 = vld [vmem:[#allocation2 + $0x50] sm:$0xff]
      %v763 = vld [vmem:[#allocation2 + $0x58] sm:$0xff]
      %v764 = vld [vmem:[#allocation2 + $0x60] sm:$0xff]
      %v765 = vld [vmem:[#allocation2 + $0x68] sm:$0xff]
      %v766 = vld [vmem:[#allocation2 + $0x70] sm:$0xff]
      %v767 = vld [vmem:[#allocation2 + $0x78] sm:$0xff]
      %768 = vadd.xlane.f32.xlu0 %v752
      %v769 = vpop.xlane.xlu0 %768
      %770 = vadd.xlane.f32.xlu0 %v753
      %v771 = vpop.xlane.xlu0 %770
      %772 = vadd.xlane.f32.xlu0 %v754
      %v773 = vpop.xlane.xlu0 %772
      %774 = vadd.xlane.f32.xlu0 %v755
      %v775 = vpop.xlane.xlu0 %774
      %776 = vadd.xlane.f32.xlu0 %v756
      %v777 = vpop.xlane.xlu0 %776
      %778 = vadd.xlane.f32.xlu0 %v757
      %v779 = vpop.xlane.xlu0 %778
      %780 = vadd.xlane.f32.xlu0 %v758
      %v781 = vpop.xlane.xlu0 %780
      %782 = vadd.xlane.f32.xlu0 %v759
      %v783 = vpop.xlane.xlu0 %782
      %784 = vadd.xlane.f32.xlu0 %v760
      %v785 = vpop.xlane.xlu0 %784
      %786 = vadd.xlane.f32.xlu0 %v761
      %v787 = vpop.xlane.xlu0 %786
      %788 = vadd.xlane.f32.xlu0 %v762
      %v789 = vpop.xlane.xlu0 %788
      %790 = vadd.xlane.f32.xlu0 %v763
      %v791 = vpop.xlane.xlu0 %790
      %792 = vadd.xlane.f32.xlu0 %v764
      %v793 = vpop.xlane.xlu0 %792
      %794 = vadd.xlane.f32.xlu0 %v765
      %v795 = vpop.xlane.xlu0 %794
      %796 = vadd.xlane.f32.xlu0 %v766
      %v797 = vpop.xlane.xlu0 %796
      %798 = vadd.xlane.f32.xlu0 %v767
      %v799 = vpop.xlane.xlu0 %798
      %v800 = vld [vmem:[#allocation3] sm:$0xff]
      %v801 = vld [vmem:[#allocation3 + $0x8] sm:$0xff]
      %v802 = vld [vmem:[#allocation3 + $0x10] sm:$0xff]
      %v803 = vld [vmem:[#allocation3 + $0x18] sm:$0xff]
      %v804 = vld [vmem:[#allocation3 + $0x20] sm:$0xff]
      %v805 = vld [vmem:[#allocation3 + $0x28] sm:$0xff]
      %v806 = vld [vmem:[#allocation3 + $0x30] sm:$0xff]
      %v807 = vld [vmem:[#allocation3 + $0x38] sm:$0xff]
      %v808 = vld [vmem:[#allocation3 + $0x40] sm:$0xff]
      %v809 = vld [vmem:[#allocation3 + $0x48] sm:$0xff]
      %v810 = vld [vmem:[#allocation3 + $0x50] sm:$0xff]
      %v811 = vld [vmem:[#allocation3 + $0x58] sm:$0xff]
      %v812 = vld [vmem:[#allocation3 + $0x60] sm:$0xff]
      %v813 = vld [vmem:[#allocation3 + $0x68] sm:$0xff]
      %v814 = vld [vmem:[#allocation3 + $0x70] sm:$0xff]
      %v815 = vld [vmem:[#allocation3 + $0x78] sm:$0xff]
      %816 = vadd.xlane.f32.xlu0 %v800
      %v817 = vpop.xlane.xlu0 %816
      %818 = vadd.xlane.f32.xlu0 %v801
      %v819 = vpop.xlane.xlu0 %818
      %820 = vadd.xlane.f32.xlu0 %v802
      %v821 = vpop.xlane.xlu0 %820
      %822 = vadd.xlane.f32.xlu0 %v803
      %v823 = vpop.xlane.xlu0 %822
      %824 = vadd.xlane.f32.xlu0 %v804
      %v825 = vpop.xlane.xlu0 %824
      %826 = vadd.xlane.f32.xlu0 %v805
      %v827 = vpop.xlane.xlu0 %826
      %828 = vadd.xlane.f32.xlu0 %v806
      %v829 = vpop.xlane.xlu0 %828
      %830 = vadd.xlane.f32.xlu0 %v807
      %v831 = vpop.xlane.xlu0 %830
      %832 = vadd.xlane.f32.xlu0 %v808
      %v833 = vpop.xlane.xlu0 %832
      %834 = vadd.xlane.f32.xlu0 %v809
      %v835 = vpop.xlane.xlu0 %834
      %836 = vadd.xlane.f32.xlu0 %v810
      %v837 = vpop.xlane.xlu0 %836
      %838 = vadd.xlane.f32.xlu0 %v811
      %v839 = vpop.xlane.xlu0 %838
      %840 = vadd.xlane.f32.xlu0 %v812
      %v841 = vpop.xlane.xlu0 %840
      %842 = vadd.xlane.f32.xlu0 %v813
      %v843 = vpop.xlane.xlu0 %842
      %844 = vadd.xlane.f32.xlu0 %v814
      %v845 = vpop.xlane.xlu0 %844
      %846 = vadd.xlane.f32.xlu0 %v815
      %v847 = vpop.xlane.xlu0 %846
      %v848 = vadd.f32 %v769, 1.0
      %v849 = vadd.f32 %v771, 1.0
      %v850 = vadd.f32 %v773, 1.0
      %v851 = vadd.f32 %v775, 1.0
      %v852 = vadd.f32 %v777, 1.0
      %v853 = vadd.f32 %v779, 1.0
      %v854 = vadd.f32 %v781, 1.0
      %v855 = vadd.f32 %v783, 1.0
      %v856 = vadd.f32 %v785, 1.0
      %v857 = vadd.f32 %v787, 1.0
      %v858 = vadd.f32 %v789, 1.0
      %v859 = vadd.f32 %v791, 1.0
      %v860 = vadd.f32 %v793, 1.0
      %v861 = vadd.f32 %v795, 1.0
      %v862 = vadd.f32 %v797, 1.0
      %v863 = vadd.f32 %v799, 1.0
      %v864 = vlog2.pop %v848
      %v865 = vmul.f32 %v864, 0.6931472
      %v866 = vlog2.pop %v849
      %v867 = vmul.f32 %v866, 0.6931472
      %v868 = vlog2.pop %v850
      %v869 = vmul.f32 %v868, 0.6931472
      %v870 = vlog2.pop %v851
      %v871 = vmul.f32 %v870, 0.6931472
      %v872 = vlog2.pop %v852
      %v873 = vmul.f32 %v872, 0.6931472
      %v874 = vlog2.pop %v853
      %v875 = vmul.f32 %v874, 0.6931472
      %v876 = vlog2.pop %v854
      %v877 = vmul.f32 %v876, 0.6931472
      %v878 = vlog2.pop %v855
      %v879 = vmul.f32 %v878, 0.6931472
      %v880 = vlog2.pop %v856
      %v881 = vmul.f32 %v880, 0.6931472
      %v882 = vlog2.pop %v857
      %v883 = vmul.f32 %v882, 0.6931472
      %v884 = vlog2.pop %v858
      %v885 = vmul.f32 %v884, 0.6931472
      %v886 = vlog2.pop %v859
      %v887 = vmul.f32 %v886, 0.6931472
      %v888 = vlog2.pop %v860
      %v889 = vmul.f32 %v888, 0.6931472
      %v890 = vlog2.pop %v861
      %v891 = vmul.f32 %v890, 0.6931472
      %v892 = vlog2.pop %v862
      %v893 = vmul.f32 %v892, 0.6931472
      %v894 = vlog2.pop %v863
      %v895 = vmul.f32 %v894, 0.6931472
      %v896 = vmul.f32 %v865, 0.5
      %v897 = vmul.f32 %v867, 0.5
      %v898 = vmul.f32 %v869, 0.5
      %v899 = vmul.f32 %v871, 0.5
      %v900 = vmul.f32 %v873, 0.5
      %v901 = vmul.f32 %v875, 0.5
      %v902 = vmul.f32 %v877, 0.5
      %v903 = vmul.f32 %v879, 0.5
      %v904 = vmul.f32 %v881, 0.5
      %v905 = vmul.f32 %v883, 0.5
      %v906 = vmul.f32 %v885, 0.5
      %v907 = vmul.f32 %v887, 0.5
      %v908 = vmul.f32 %v889, 0.5
      %v909 = vmul.f32 %v891, 0.5
      %v910 = vmul.f32 %v893, 0.5
      %v911 = vmul.f32 %v895, 0.5
      %v912 = vadd.f32 %v817, 1.0
      %v913 = vadd.f32 %v819, 1.0
      %v914 = vadd.f32 %v821, 1.0
      %v915 = vadd.f32 %v823, 1.0
      %v916 = vadd.f32 %v825, 1.0
      %v917 = vadd.f32 %v827, 1.0
      %v918 = vadd.f32 %v829, 1.0
      %v919 = vadd.f32 %v831, 1.0
      %v920 = vadd.f32 %v833, 1.0
      %v921 = vadd.f32 %v835, 1.0
      %v922 = vadd.f32 %v837, 1.0
      %v923 = vadd.f32 %v839, 1.0
      %v924 = vadd.f32 %v841, 1.0
      %v925 = vadd.f32 %v843, 1.0
      %v926 = vadd.f32 %v845, 1.0
      %v927 = vadd.f32 %v847, 1.0
      %v928 = vlog2.pop %v912
      %v929 = vmul.f32 %v928, 0.6931472
      %v930 = vlog2.pop %v913
      %v931 = vmul.f32 %v930, 0.6931472
      %v932 = vlog2.pop %v914
      %v933 = vmul.f32 %v932, 0.6931472
      %v934 = vlog2.pop %v915
      %v935 = vmul.f32 %v934, 0.6931472
      %v936 = vlog2.pop %v916
      %v937 = vmul.f32 %v936, 0.6931472
      %v938 = vlog2.pop %v917
      %v939 = vmul.f32 %v938, 0.6931472
      %v940 = vlog2.pop %v918
      %v941 = vmul.f32 %v940, 0.6931472
      %v942 = vlog2.pop %v919
      %v943 = vmul.f32 %v942, 0.6931472
      %v944 = vlog2.pop %v920
      %v945 = vmul.f32 %v944, 0.6931472
      %v946 = vlog2.pop %v921
      %v947 = vmul.f32 %v946, 0.6931472
      %v948 = vlog2.pop %v922
      %v949 = vmul.f32 %v948, 0.6931472
      %v950 = vlog2.pop %v923
      %v951 = vmul.f32 %v950, 0.6931472
      %v952 = vlog2.pop %v924
      %v953 = vmul.f32 %v952, 0.6931472
      %v954 = vlog2.pop %v925
      %v955 = vmul.f32 %v954, 0.6931472
      %v956 = vlog2.pop %v926
      %v957 = vmul.f32 %v956, 0.6931472
      %v958 = vlog2.pop %v927
      %v959 = vmul.f32 %v958, 0.6931472
      %v960 = vmul.f32 %v929, 0.02
      %v961 = vmul.f32 %v931, 0.02
      %v962 = vmul.f32 %v933, 0.02
      %v963 = vmul.f32 %v935, 0.02
      %v964 = vmul.f32 %v937, 0.02
      %v965 = vmul.f32 %v939, 0.02
      %v966 = vmul.f32 %v941, 0.02
      %v967 = vmul.f32 %v943, 0.02
      %v968 = vmul.f32 %v945, 0.02
      %v969 = vmul.f32 %v947, 0.02
      %v970 = vmul.f32 %v949, 0.02
      %v971 = vmul.f32 %v951, 0.02
      %v972 = vmul.f32 %v953, 0.02
      %v973 = vmul.f32 %v955, 0.02
      %v974 = vmul.f32 %v957, 0.02
      %v975 = vmul.f32 %v959, 0.02
      %v976 = vadd.f32 %v896, %v960
      %v977 = vadd.f32 %v897, %v961
      %v978 = vadd.f32 %v898, %v962
      %v979 = vadd.f32 %v899, %v963
      %v980 = vadd.f32 %v900, %v964
      %v981 = vadd.f32 %v901, %v965
      %v982 = vadd.f32 %v902, %v966
      %v983 = vadd.f32 %v903, %v967
      %v984 = vadd.f32 %v904, %v968
      %v985 = vadd.f32 %v905, %v969
      %v986 = vadd.f32 %v906, %v970
      %v987 = vadd.f32 %v907, %v971
      %v988 = vadd.f32 %v908, %v972
      %v989 = vadd.f32 %v909, %v973
      %v990 = vadd.f32 %v910, %v974
      %v991 = vadd.f32 %v911, %v975
      %v1008 = vlaneseq
      %v1009 = vshrl.u32 %v1008, 7
      %v1010 = vsub.s32 %v501, %v1009
      %v1011 = vrot.slane %v976, %v1010
      %v1012 = vadd.s32 %v501, 4294967288
      %v1013 = vlaneseq
      %v1014 = vshrl.u32 %v1013, 7
      %v1015 = vsub.s32 %v1012, %v1014
      %v1016 = vrot.slane %v977, %v1015
      %vm1017 = vcmask 130112
      %v1018 = vsel %vm1017, %v1016, %v1011
      %v1019 = vadd.s32 %v501, 4294967280
      %v1020 = vlaneseq
      %v1021 = vshrl.u32 %v1020, 7
      %v1022 = vsub.s32 %v1019, %v1021
      %v1023 = vrot.slane %v978, %v1022
      %vm1024 = vcmask 195712
      %v1025 = vsel %vm1024, %v1023, %v1018
      %v1026 = vadd.s32 %v501, 4294967272
      %v1027 = vlaneseq
      %v1028 = vshrl.u32 %v1027, 7
      %v1029 = vsub.s32 %v1026, %v1028
      %v1030 = vrot.slane %v979, %v1029
      %vm1031 = vcmask 261312
      %v1032 = vsel %vm1031, %v1030, %v1025
      %v1033 = vadd.s32 %v501, 4294967264
      %v1034 = vlaneseq
      %v1035 = vshrl.u32 %v1034, 7
      %v1036 = vsub.s32 %v1033, %v1035
      %v1037 = vrot.slane %v980, %v1036
      %vm1038 = vcmask 326912
      %v1039 = vsel %vm1038, %v1037, %v1032
      %v1040 = vadd.s32 %v501, 4294967256
      %v1041 = vlaneseq
      %v1042 = vshrl.u32 %v1041, 7
      %v1043 = vsub.s32 %v1040, %v1042
      %v1044 = vrot.slane %v981, %v1043
      %vm1045 = vcmask 392512
      %v1046 = vsel %vm1045, %v1044, %v1039
      %v1047 = vadd.s32 %v501, 4294967248
      %v1048 = vlaneseq
      %v1049 = vshrl.u32 %v1048, 7
      %v1050 = vsub.s32 %v1047, %v1049
      %v1051 = vrot.slane %v982, %v1050
      %vm1052 = vcmask 458112
      %v1053 = vsel %vm1052, %v1051, %v1046
      %v1054 = vadd.s32 %v501, 4294967240
      %v1055 = vlaneseq
      %v1056 = vshrl.u32 %v1055, 7
      %v1057 = vsub.s32 %v1054, %v1056
      %v1058 = vrot.slane %v983, %v1057
      %vm1059 = vcmask 523712
      %v1060 = vsel %vm1059, %v1058, %v1053
      %v1061 = vadd.s32 %v501, 4294967232
      %v1062 = vlaneseq
      %v1063 = vshrl.u32 %v1062, 7
      %v1064 = vsub.s32 %v1061, %v1063
      %v1065 = vrot.slane %v984, %v1064
      %vm1066 = vcmask 589312
      %v1067 = vsel %vm1066, %v1065, %v1060
      %v1068 = vadd.s32 %v501, 4294967224
      %v1069 = vlaneseq
      %v1070 = vshrl.u32 %v1069, 7
      %v1071 = vsub.s32 %v1068, %v1070
      %v1072 = vrot.slane %v985, %v1071
      %vm1073 = vcmask 654912
      %v1074 = vsel %vm1073, %v1072, %v1067
      %v1075 = vadd.s32 %v501, 4294967216
      %v1076 = vlaneseq
      %v1077 = vshrl.u32 %v1076, 7
      %v1078 = vsub.s32 %v1075, %v1077
      %v1079 = vrot.slane %v986, %v1078
      %vm1080 = vcmask 720512
      %v1081 = vsel %vm1080, %v1079, %v1074
      %v1082 = vadd.s32 %v501, 4294967208
      %v1083 = vlaneseq
      %v1084 = vshrl.u32 %v1083, 7
      %v1085 = vsub.s32 %v1082, %v1084
      %v1086 = vrot.slane %v987, %v1085
      %vm1087 = vcmask 786112
      %v1088 = vsel %vm1087, %v1086, %v1081
      %v1089 = vadd.s32 %v501, 4294967200
      %v1090 = vlaneseq
      %v1091 = vshrl.u32 %v1090, 7
      %v1092 = vsub.s32 %v1089, %v1091
      %v1093 = vrot.slane %v988, %v1092
      %vm1094 = vcmask 851712
      %v1095 = vsel %vm1094, %v1093, %v1088
      %v1096 = vadd.s32 %v501, 4294967192
      %v1097 = vlaneseq
      %v1098 = vshrl.u32 %v1097, 7
      %v1099 = vsub.s32 %v1096, %v1098
      %v1100 = vrot.slane %v989, %v1099
      %vm1101 = vcmask 917312
      %v1102 = vsel %vm1101, %v1100, %v1095
      %v1103 = vadd.s32 %v501, 4294967184
      %v1104 = vlaneseq
      %v1105 = vshrl.u32 %v1104, 7
      %v1106 = vsub.s32 %v1103, %v1105
      %v1107 = vrot.slane %v990, %v1106
      %vm1108 = vcmask 982912
      %v1109 = vsel %vm1108, %v1107, %v1102
      %v1110 = vadd.s32 %v501, 4294967176
      %v1111 = vlaneseq
      %v1112 = vshrl.u32 %v1111, 7
      %v1113 = vsub.s32 %v1110, %v1112
      %v1114 = vrot.slane %v991, %v1113
      %vm1115 = vcmask 1048512
      %v1116 = vsel %vm1115, %v1114, %v1109
      %1118 = vst [vmem:[#allocation4] sm:$0x1] %v1116
    $region25: #{tpu_custom_call.1} parent=1 // pred_fallthru
      _
    // Predicated region
    $region26: #{tpu_custom_call.1} parent=1 // pred_check
      _
    $region27: #{tpu_custom_call.1} parent=1 // pred_check_branch
      %1120 = sbr.rel (0) target = $region29
    $region28: #{tpu_custom_call.1} parent=1 // pred_region
      %s1122 = ssub.s32 16, 16
      %1123 = vsyncadd [#allocation5], %s1122
      %s1125 = sshll.u32 [#allocation4], 4
      %s1126 = int_to_ptr.vmem [resolvable:$true] %s1125
      %1128 = dma.vmem_to_hbm [thread:$0]  %s1126, 16, %s4, [#allocation5]
    $region29: #{tpu_custom_call.1} parent=1 // pred_fallthru
      _
    // Predicated region
    $region30: #{tpu_custom_call.1} parent=1 // pred_check
      _
    $region31: #{tpu_custom_call.1} parent=1 // pred_check_branch
      %1130 = sbr.rel (0) target = $region33
    $region32: #{tpu_custom_call.1} parent=1 // pred_region
      %1131 = dma.done [#allocation5], 16
    $region33: #{tpu_custom_call.1} parent=1 // pred_fallthru
      _
    %1132 = vsyncpa [#allocation5], 1

</llo_original>
